<compile_context>
chip_gen: v7x
topology: tpu7x:2x2x1
jax: 0.10.0
libtpu: 0.0.40
codegen_flags: <defaults>
</compile_context>

<pallas_src>
import functools

import jax
import jax.numpy as jnp
from jax.experimental import pallas as pl
from jax.experimental.pallas import tpu as pltpu

# ---------------------------------------------------------------------------
# Model hyper-parameters (PyTorch defaults)
# ---------------------------------------------------------------------------
HIDDEN_IP = 100       # hidden_size_IP
HIDDEN_REST = 100     # hidden_size_rest
ALPHA = 0.01          # LeakyReLU negative slope
STATE_SIZE = 2
LATENT_SIZE = 5
CONDI_SIZE = 2 + 2
IN_SIZE = LATENT_SIZE + CONDI_SIZE    # 9
BN_EPS = 1e-5

# Padded sizes used inside the kernel.
IN_PAD = 16           # 9  -> 16  (fused concat, single layer-1 matmul)
HIDDEN_PAD = 128      # 100 -> 128 (native lane width)
OUT_PAD = 128         # 2   -> 128 (lane-dense output store; sliced in wrapper)

# Row layout of the single sublane-stacked parameter array (PARAM_ROWS, 128).
_W1_R0 = 0                              # rows [0, 16)   : fc1 weight (padded)
_VEC_R0 = _W1_R0 + IN_PAD               # rows [16, 24)  : packed per-feat vecs
_W2_R0 = _VEC_R0 + 8                    # rows [24, 152) : fc2 weight (padded)
_W3_R0 = _W2_R0 + HIDDEN_PAD            # rows [152,280) : output weight (padded)
PARAM_ROWS = _W3_R0 + HIDDEN_PAD        # 280 (multiple of 8 -> aligned slices)
_ROW_G1, _ROW_BE1, _ROW_G2, _ROW_BE2, _ROW_B3 = 0, 1, 2, 3, 4


# ---------------------------------------------------------------------------
# Pallas kernel: t_block independent decoder calls per grid step.
# ---------------------------------------------------------------------------
def _decoder_kernel(x_ref, p_ref, o_ref, *, alpha):
    tb, b, _ = x_ref.shape               # (t_block, batch, IN_PAD)

    # Parameters: 8-sublane-aligned static slices of the resident param block.
    w1 = p_ref[_W1_R0:_W1_R0 + IN_PAD, :]               # (16, 128)
    vecs = p_ref[_VEC_R0:_VEC_R0 + 8, :]                 # (8, 128)
    w2 = p_ref[_W2_R0:_W2_R0 + HIDDEN_PAD, :]            # (128, 128)
    w3 = p_ref[_W3_R0:_W3_R0 + HIDDEN_PAD, :]            # (128, 128)
    g1, be1 = vecs[_ROW_G1:_ROW_G1 + 1, :], vecs[_ROW_BE1:_ROW_BE1 + 1, :]
    g2, be2 = vecs[_ROW_G2:_ROW_G2 + 1, :], vecs[_ROW_BE2:_ROW_BE2 + 1, :]
    b3 = vecs[_ROW_B3:_ROW_B3 + 1, :]

    # Fuse all calls of this block into one M = tb*b matmul slab.
    x = x_ref[...].reshape(tb * b, IN_PAD)

    def bn_lrelu(h, g, be):
        # BatchNorm1d, training mode, computed PER CALL: reduce over each
        # call's batch (axis=1 of the (tb, b, 128) view), then affine + LReLU
        # back on the fused 2-D slab.
        h3 = h.reshape(tb, b, HIDDEN_PAD)
        mu = jnp.mean(h3, axis=1, keepdims=True)
        d = h3 - mu
        var = jnp.mean(d * d, axis=1, keepdims=True)
        hn = (d * jax.lax.rsqrt(var + BN_EPS)).reshape(tb * b, HIDDEN_PAD)
        hn = hn * g + be
        return jnp.maximum(hn, alpha * hn)     # LeakyReLU, 0 < alpha < 1

    # Layer 1 (fc1 bias omitted: cancelled exactly by BN mean subtraction).
    h = jnp.dot(x, w1, preferred_element_type=jnp.float32)
    h = bn_lrelu(h, g1, be1)
    # Layer 2 (fc2 bias likewise omitted).
    h = jnp.dot(h, w2, preferred_element_type=jnp.float32)
    h = bn_lrelu(h, g2, be2)
    # Output layer + tanh (real columns are [:STATE_SIZE]; rest are zeros).
    out = jnp.dot(h, w3, preferred_element_type=jnp.float32) + b3
    o_ref[...] = jnp.tanh(out).reshape(tb, b, OUT_PAD)


def decoder_forward(z, c, params, *, alpha=ALPHA, t_block=8):
    """Decoder forward for stacked calls.

    z: (T, B, latent) or (B, latent);  c: (T, B, condi) or (B, condi).
    Returns (T, B, state) or (B, state).
    """
    squeeze = z.ndim == 2
    if squeeze:
        z, c = z[None], c[None]
    T, B = z.shape[0], z.shape[1]
    assert B >= 2, "training-mode BatchNorm needs batch >= 2 per call"
    assert z.shape[2] == LATENT_SIZE and c.shape == (T, B, CONDI_SIZE)

    # Fused concat + lane-pad of the input: z -> cols 0..4, c -> cols 5..8.
    x = jnp.zeros((T, B, IN_PAD), jnp.float32)
    x = x.at[:, :, :LATENT_SIZE].set(z.astype(jnp.float32))
    x = x.at[:, :, LATENT_SIZE:IN_SIZE].set(c.astype(jnp.float32))

    # Pad the call axis to a multiple of t_block (padded calls are zeros and
    # get sliced away; whole calls never straddle a block, so BN is exact).
    t_block = max(1, min(t_block, T))
    n_blocks = pl.cdiv(T, t_block)
    t_pad = n_blocks * t_block
    if t_pad != T:
        x = jnp.pad(x, ((0, t_pad - T), (0, 0), (0, 0)))

    out = pl.pallas_call(
        functools.partial(_decoder_kernel, alpha=alpha),
        out_shape=jax.ShapeDtypeStruct((t_pad, B, OUT_PAD), jnp.float32),
        grid=(n_blocks,),
        in_specs=[
            pl.BlockSpec((t_block, B, IN_PAD), lambda t: (t, 0, 0)),
            # Constant index_map: parameters DMA'd once, VMEM-resident after.
            pl.BlockSpec((PARAM_ROWS, HIDDEN_PAD), lambda t: (0, 0)),
        ],
        out_specs=pl.BlockSpec((t_block, B, OUT_PAD), lambda t: (t, 0, 0)),
        compiler_params=pltpu.CompilerParams(
            dimension_semantics=("parallel",)),   # shard calls across v7x TCs
    )(x, params)

    out = out[:T, :, :STATE_SIZE]
    return out[0] if squeeze else out


# ---------------------------------------------------------------------------
# Deterministic parameter init (PyTorch-style uniform +/- 1/sqrt(fan_in)).
# Raw params feed the pure-JAX reference; pack_params builds the single
# sublane-stacked, lane-padded parameter array consumed by the kernel.
# ---------------------------------------------------------------------------
def init_params(key):
    def linear(key, fan_in, fan_out):
        kw, kb = jax.random.split(key)
        bound = 1.0 / jnp.sqrt(jnp.float32(fan_in))
        w = jax.random.uniform(kw, (fan_in, fan_out), jnp.float32, -bound, bound)
        b = jax.random.uniform(kb, (fan_out,), jnp.float32, -bound, bound)
        return w, b

    k1, k2, k3 = jax.random.split(key, 3)
    w1, b1 = linear(k1, IN_SIZE, HIDDEN_IP)
    w2, b2 = linear(k2, HIDDEN_IP, HIDDEN_REST)
    w3, b3 = linear(k3, HIDDEN_REST, STATE_SIZE)
    return {
        "w1": w1, "b1": b1,
        "g1": jnp.ones((HIDDEN_IP,), jnp.float32),
        "be1": jnp.zeros((HIDDEN_IP,), jnp.float32),
        "w2": w2, "b2": b2,
        "g2": jnp.ones((HIDDEN_REST,), jnp.float32),
        "be2": jnp.zeros((HIDDEN_REST,), jnp.float32),
        "w3": w3, "b3": b3,
    }


def pack_params(raw):
    """Stack every weight/vector into one (PARAM_ROWS, 128) array (1 DMA)."""
    p = jnp.zeros((PARAM_ROWS, HIDDEN_PAD), jnp.float32)
    # fc1 weight, padded 9 -> 16 rows / 100 -> 128 cols.
    p = p.at[_W1_R0:_W1_R0 + IN_SIZE, :HIDDEN_IP].set(raw["w1"])
    # Packed per-feature vectors (gamma/beta for both BNs, output bias).
    p = p.at[_VEC_R0 + _ROW_G1, :HIDDEN_IP].set(raw["g1"])
    p = p.at[_VEC_R0 + _ROW_BE1, :HIDDEN_IP].set(raw["be1"])
    p = p.at[_VEC_R0 + _ROW_G2, :HIDDEN_REST].set(raw["g2"])
    p = p.at[_VEC_R0 + _ROW_BE2, :HIDDEN_REST].set(raw["be2"])
    p = p.at[_VEC_R0 + _ROW_B3, :STATE_SIZE].set(raw["b3"])
    # fc2 and output weights, zero-padded to 128x128.
    p = p.at[_W2_R0:_W2_R0 + HIDDEN_IP, :HIDDEN_REST].set(raw["w2"])
    p = p.at[_W3_R0:_W3_R0 + HIDDEN_REST, :STATE_SIZE].set(raw["w3"])
    # fc1/fc2 biases (raw["b1"], raw["b2"]) intentionally NOT packed: they are
    # exactly cancelled by the training-mode BatchNorm mean subtraction.
    return p


# Pure-JAX reference (faithful to the PyTorch module, incl. fc biases).
def decoder_reference(z, c, raw, *, alpha=ALPHA):
    def one_call(zz, cc):
        x = jnp.concatenate([zz, cc], axis=1).astype(jnp.float32)

        def bn_lrelu(h, g, be):
            mu = jnp.mean(h, axis=0, keepdims=True)
            var = jnp.mean((h - mu) ** 2, axis=0, keepdims=True)
            h = (h - mu) / jnp.sqrt(var + BN_EPS) * g + be
            return jnp.where(h >= 0, h, alpha * h)

        h = bn_lrelu(x @ raw["w1"] + raw["b1"], raw["g1"], raw["be1"])
        h = bn_lrelu(h @ raw["w2"] + raw["b2"], raw["g2"], raw["be2"])
        return jnp.tanh(h @ raw["w3"] + raw["b3"])

    if z.ndim == 2:
        return one_call(z, c)
    return jax.vmap(one_call)(z, c)


if __name__ == "__main__":
    key = jax.random.PRNGKey(0)
    kp, kz, kc = jax.random.split(key, 3)

    raw_params = init_params(kp)
    packed_params = pack_params(raw_params)

    # 16 stacked decoder calls (e.g. rollout timesteps), batch 8 each.
    T, B = 16, 8
    z = jax.random.normal(kz, (T, B, LATENT_SIZE), jnp.float32)
    c = jax.random.normal(kc, (T, B, CONDI_SIZE), jnp.float32)

    out = decoder_forward(z, c, packed_params, t_block=8)
    out = jax.block_until_ready(out)
    ref = decoder_reference(z, c, raw_params)
    assert out.shape == (T, B, STATE_SIZE)
    assert jnp.allclose(out, ref, atol=1e-5, rtol=1e-5), "mismatch vs reference (stacked)"

    # Single-call convenience path (2-D z/c) still works.
    out1 = jax.block_until_ready(decoder_forward(z[0], c[0], packed_params))
    ref1 = decoder_reference(z[0], c[0], raw_params)
    assert out1.shape == (B, STATE_SIZE)
    assert jnp.allclose(out1, ref1, atol=1e-5, rtol=1e-5), "mismatch vs reference (single)"

    print("KERNEL_OK")
</pallas_src>

<mosaic_0001>
module attributes {stable_mosaic.version = 11 : i64} {
  func.func @_decoder_kernel(%arg0: i32, %arg1: memref<8x8x16xf32, #tpu.memory_space<vmem>>, %arg2: memref<280x128xf32, #tpu.memory_space<vmem>>, %arg3: memref<8x8x128xf32, #tpu.memory_space<vmem>>) attributes {dimension_semantics = [#tpu.dimension_semantics<parallel>], iteration_bounds = array<i64: 2>, scalar_prefetch = 0 : i64, scratch_operands = 0 : i64, tpu.core_type = #tpu.core_type<tc>, window_params = [{transform_indices = @transform_0, window_bounds = array<i64: 8, 8, 16>}, {pipeline_mode = #tpu.pipeline_mode<synchronous>, transform_indices = @transform_1, window_bounds = array<i64: 280, 128>}, {transform_indices = @transform_2, window_bounds = array<i64: 8, 8, 128>}]} {
    %c0 = arith.constant 0 : index
    %c0_0 = arith.constant 0 : index
    %0 = vector.load %arg2[%c0, %c0_0] : memref<280x128xf32, #tpu.memory_space<vmem>>, vector<16x128xf32>
    %c16 = arith.constant 16 : index
    %c0_1 = arith.constant 0 : index
    %1 = vector.load %arg2[%c16, %c0_1] : memref<280x128xf32, #tpu.memory_space<vmem>>, vector<8x128xf32>
    %c24 = arith.constant 24 : index
    %c0_2 = arith.constant 0 : index
    %2 = vector.load %arg2[%c24, %c0_2] : memref<280x128xf32, #tpu.memory_space<vmem>>, vector<128x128xf32>
    %c152 = arith.constant 152 : index
    %c0_3 = arith.constant 0 : index
    %3 = vector.load %arg2[%c152, %c0_3] : memref<280x128xf32, #tpu.memory_space<vmem>>, vector<128x128xf32>
    %4 = vector.extract_strided_slice %1 {offsets = [0, 0], sizes = [1, 128], strides = [1, 1]} : vector<8x128xf32> to vector<1x128xf32>
    %5 = vector.extract_strided_slice %1 {offsets = [1, 0], sizes = [1, 128], strides = [1, 1]} : vector<8x128xf32> to vector<1x128xf32>
    %6 = vector.extract_strided_slice %1 {offsets = [2, 0], sizes = [1, 128], strides = [1, 1]} : vector<8x128xf32> to vector<1x128xf32>
    %7 = vector.extract_strided_slice %1 {offsets = [3, 0], sizes = [1, 128], strides = [1, 1]} : vector<8x128xf32> to vector<1x128xf32>
    %8 = vector.extract_strided_slice %1 {offsets = [4, 0], sizes = [1, 128], strides = [1, 1]} : vector<8x128xf32> to vector<1x128xf32>
    %c0_4 = arith.constant 0 : index
    %c0_5 = arith.constant 0 : index
    %c0_6 = arith.constant 0 : index
    %9 = vector.load %arg1[%c0_4, %c0_5, %c0_6] : memref<8x8x16xf32, #tpu.memory_space<vmem>>, vector<8x8x16xf32>
    %10 = vector.shape_cast %9 : vector<8x8x16xf32> to vector<64x16xf32>
    %cst = arith.constant dense<0.000000e+00> : vector<64x128xf32>
    %11 = tpu.matmul %10, %0, %cst {dimension_numbers = #tpu.dot_dimension_numbers<[1], [0], [0], [1], [0, 0, 1, 1], [], []>} : vector<64x16xf32>, vector<16x128xf32>, vector<64x128xf32> -> vector<64x128xf32>
    %12 = vector.shape_cast %11 : vector<64x128xf32> to vector<8x8x128xf32>
    %cst_7 = arith.constant dense<0.000000e+00> : vector<8x128xf32>
    %13 = vector.multi_reduction <add>, %12, %cst_7 [1] : vector<8x8x128xf32> to vector<8x128xf32>
    %14 = vector.shape_cast %13 : vector<8x128xf32> to vector<8x1x128xf32>
    %cst_8 = arith.constant 8.000000e+00 : f32
    %15 = vector.broadcast %cst_8 : f32 to vector<8x1x128xf32>
    %16 = arith.divf %14, %15 : vector<8x1x128xf32>
    %17 = vector.broadcast %16 : vector<8x1x128xf32> to vector<8x8x128xf32>
    %18 = arith.subf %12, %17 : vector<8x8x128xf32>
    %19 = arith.mulf %18, %18 : vector<8x8x128xf32>
    %cst_9 = arith.constant dense<0.000000e+00> : vector<8x128xf32>
    %20 = vector.multi_reduction <add>, %19, %cst_9 [1] : vector<8x8x128xf32> to vector<8x128xf32>
    %21 = vector.shape_cast %20 : vector<8x128xf32> to vector<8x1x128xf32>
    %cst_10 = arith.constant 8.000000e+00 : f32
    %22 = vector.broadcast %cst_10 : f32 to vector<8x1x128xf32>
    %23 = arith.divf %21, %22 : vector<8x1x128xf32>
    %cst_11 = arith.constant 9.99999974E-6 : f32
    %24 = vector.broadcast %cst_11 : f32 to vector<8x1x128xf32>
    %25 = arith.addf %23, %24 : vector<8x1x128xf32>
    %26 = math.rsqrt %25 : vector<8x1x128xf32>
    %27 = vector.broadcast %26 : vector<8x1x128xf32> to vector<8x8x128xf32>
    %28 = arith.mulf %18, %27 : vector<8x8x128xf32>
    %29 = vector.shape_cast %28 : vector<8x8x128xf32> to vector<64x128xf32>
    %30 = vector.broadcast %4 : vector<1x128xf32> to vector<64x128xf32>
    %31 = arith.mulf %29, %30 : vector<64x128xf32>
    %32 = vector.broadcast %5 : vector<1x128xf32> to vector<64x128xf32>
    %33 = arith.addf %31, %32 : vector<64x128xf32>
    %cst_12 = arith.constant 0.00999999977 : f32
    %34 = vector.broadcast %cst_12 : f32 to vector<64x128xf32>
    %35 = arith.mulf %34, %33 : vector<64x128xf32>
    %36 = arith.maximumf %33, %35 : vector<64x128xf32>
    %cst_13 = arith.constant dense<0.000000e+00> : vector<64x128xf32>
    %37 = tpu.matmul %36, %2, %cst_13 {dimension_numbers = #tpu.dot_dimension_numbers<[1], [0], [0], [1], [0, 0, 1, 1], [], []>} : vector<64x128xf32>, vector<128x128xf32>, vector<64x128xf32> -> vector<64x128xf32>
    %38 = vector.shape_cast %37 : vector<64x128xf32> to vector<8x8x128xf32>
    %cst_14 = arith.constant dense<0.000000e+00> : vector<8x128xf32>
    %39 = vector.multi_reduction <add>, %38, %cst_14 [1] : vector<8x8x128xf32> to vector<8x128xf32>
    %40 = vector.shape_cast %39 : vector<8x128xf32> to vector<8x1x128xf32>
    %cst_15 = arith.constant 8.000000e+00 : f32
    %41 = vector.broadcast %cst_15 : f32 to vector<8x1x128xf32>
    %42 = arith.divf %40, %41 : vector<8x1x128xf32>
    %43 = vector.broadcast %42 : vector<8x1x128xf32> to vector<8x8x128xf32>
    %44 = arith.subf %38, %43 : vector<8x8x128xf32>
    %45 = arith.mulf %44, %44 : vector<8x8x128xf32>
    %cst_16 = arith.constant dense<0.000000e+00> : vector<8x128xf32>
    %46 = vector.multi_reduction <add>, %45, %cst_16 [1] : vector<8x8x128xf32> to vector<8x128xf32>
    %47 = vector.shape_cast %46 : vector<8x128xf32> to vector<8x1x128xf32>
    %cst_17 = arith.constant 8.000000e+00 : f32
    %48 = vector.broadcast %cst_17 : f32 to vector<8x1x128xf32>
    %49 = arith.divf %47, %48 : vector<8x1x128xf32>
    %cst_18 = arith.constant 9.99999974E-6 : f32
    %50 = vector.broadcast %cst_18 : f32 to vector<8x1x128xf32>
    %51 = arith.addf %49, %50 : vector<8x1x128xf32>
    %52 = math.rsqrt %51 : vector<8x1x128xf32>
    %53 = vector.broadcast %52 : vector<8x1x128xf32> to vector<8x8x128xf32>
    %54 = arith.mulf %44, %53 : vector<8x8x128xf32>
    %55 = vector.shape_cast %54 : vector<8x8x128xf32> to vector<64x128xf32>
    %56 = vector.broadcast %6 : vector<1x128xf32> to vector<64x128xf32>
    %57 = arith.mulf %55, %56 : vector<64x128xf32>
    %58 = vector.broadcast %7 : vector<1x128xf32> to vector<64x128xf32>
    %59 = arith.addf %57, %58 : vector<64x128xf32>
    %cst_19 = arith.constant 0.00999999977 : f32
    %60 = vector.broadcast %cst_19 : f32 to vector<64x128xf32>
    %61 = arith.mulf %60, %59 : vector<64x128xf32>
    %62 = arith.maximumf %59, %61 : vector<64x128xf32>
    %cst_20 = arith.constant dense<0.000000e+00> : vector<64x128xf32>
    %63 = tpu.matmul %62, %3, %cst_20 {dimension_numbers = #tpu.dot_dimension_numbers<[1], [0], [0], [1], [0, 0, 1, 1], [], []>} : vector<64x128xf32>, vector<128x128xf32>, vector<64x128xf32> -> vector<64x128xf32>
    %64 = vector.broadcast %8 : vector<1x128xf32> to vector<64x128xf32>
    %65 = arith.addf %63, %64 : vector<64x128xf32>
    %66 = math.tanh %65 : vector<64x128xf32>
    %67 = vector.shape_cast %66 : vector<64x128xf32> to vector<8x8x128xf32>
    %c0_21 = arith.constant 0 : index
    %c0_22 = arith.constant 0 : index
    %c0_23 = arith.constant 0 : index
    %68 = vector.load %arg3[%c0_21, %c0_22, %c0_23] : memref<8x8x128xf32, #tpu.memory_space<vmem>>, vector<8x8x128xf32>
    tpu.vector_store %arg3[%c0_21, %c0_22, %c0_23], %67 {strides = array<i32>} : memref<8x8x128xf32, #tpu.memory_space<vmem>>, vector<8x8x128xf32>,
    return
  }
  func.func @transform_0(%arg0: i32) -> (i32, i32, i32) {
    %c0_i32 = arith.constant 0 : i32
    %c0_i32_0 = arith.constant 0 : i32
    %c0_i32_1 = arith.constant 0 : i32
    return %arg0, %c0_i32, %c0_i32_0 : i32, i32, i32
  }
  func.func @transform_1(%arg0: i32) -> (i32, i32) {
    %c0_i32 = arith.constant 0 : i32
    %c0_i32_0 = arith.constant 0 : i32
    %c0_i32_1 = arith.constant 0 : i32
    return %c0_i32, %c0_i32_0 : i32, i32
  }
  func.func @transform_2(%arg0: i32) -> (i32, i32, i32) {
    %c0_i32 = arith.constant 0 : i32
    %c0_i32_0 = arith.constant 0 : i32
    %c0_i32_1 = arith.constant 0 : i32
    return %arg0, %c0_i32, %c0_i32_0 : i32, i32, i32
  }
}

</mosaic_0001>

<llo_original>
// kernel: tpu_custom_call.1
$region0: #{tpu_custom_call.1}
  #allocation0 [shape = 'u32[]', space=smem, size = 0x4, offset = 0x4, fixed_abs, tag = 'smem constant byte address 0x4 - core index']
  #allocation1 [shape = 'u32[144,128]{1,0:T(1,128)}', space=vmem, size = 0x12000, scoped, tag = 'internal scratch']
  %s0 = inlined_call_operand.hbm [shape: f32[16,8,16], index: 0, kind: input, shape index: {}]
  %s1 = inlined_call_operand.hbm [shape: f32[280,128], index: 1, kind: input, shape index: {}]
  %s2 = inlined_call_operand.hbm [shape: f32[16,8,128], index: 2, kind: output, shape index: {}]
  %s3 = sld [smem:[#allocation0]]
  $region49: #{tpu_custom_call.1} parent=0
    _
  %s5 = ssub.s32 1, %s3
  %s6 = scalar_select 0, %s5, %s3
  $region1: #{tpu_custom_call.1} parent=0
    #allocation2 [shape = 'u8[65536]{0}', space=vmem, size = 0x10000, scoped, tag = 'input window, operand 0']
    #allocation3 [shape = 's32[2]{0}', space=sflag, size = 0x8, scoped, tag = 'scoped memory for tpu_custom_call.1']
    #allocation4 [shape = 's32[2]{0}', space=sflag, size = 0x8, scoped, tag = 'scoped memory for tpu_custom_call.1']
    #allocation5 [shape = 'u8[143360]{0}', space=vmem, size = 0x23000, scoped, tag = 'input window, operand 1, single buffered']
    #allocation6 [shape = 's32[1]{0}', space=sflag, size = 0x4, scoped, tag = 'scoped memory for tpu_custom_call.1']
    #allocation7 [shape = 'u8[65536]{0}', space=vmem, size = 0x10000, scoped, tag = 'output window, operand 0']
    %7 = vsyncpa [#allocation3], 0
    %s8 = scalar_lea.sflag [#allocation3], 1
    %9 = vsyncpa %s8, 0
    %10 = vsyncpa [#allocation6], 0
    %11 = vsyncpa [#allocation4], 0
    %s12 = scalar_lea.sflag [#allocation4], 1
    %13 = vsyncpa %s12, 0
    loop: start=0, step=1, limit=4
    $region2: #{tpu_custom_call.1} parent=1 // loop_pre_header
      _
    $region3: #{tpu_custom_call.1} parent=1 // loop_header
      %s15 = sphi 0, %s19
      %p16 = scmp.ge.s32.totalorder %s15, 4
      %s25 = sphi 0, %s27
      %s28 = sphi 0, %s25
      %s29 = sphi 0, %s28
      %s45 = sphi 0, %s29
      %s49 = sphi 0, %s49
      %s51 = sphi 0, %s49
      %s52 = sphi 0, %s51
      %s66 = sphi 0, %s52
      %s72 = sphi 0, %s74
      %s75 = sphi 0, %s72
      %s76 = sphi 0, %s75
      %s92 = sphi 0, %s76
    $region4: #{tpu_custom_call.1} parent=1 // loop_header_branch
      %18 = sbr.rel (%p16) target = $region8
    $region5: #{tpu_custom_call.1} parent=1 // loop_body
      %s20 = ssub.s32 %s15, 1
      %s21 = ssub.s32 %s15, 2
      %s22 = sadd.s32 %s15, 1
      %s23 = ssub.s32 %s15, %s22
      %p24 = scmp.eq.s32.totalorder %s23, 0
      %s26 = sadd.s32 %s25, 1
      %s27 = scalar_select %p24, %s25, %s26
      %p30 = pneg %p24
      %p31 = scmp.eq.s32.totalorder %s15, 1
      %p32 = por %p30, %p31
      %p33 = scmp.ne.s32.totalorder %s25, %s28
      %p34 = scmp.eq.s32.totalorder %s15, 0
      %p35 = por %p33, %p34
      %p36 = scmp.ne.s32.totalorder %s25, %s28
      %p37 = scmp.eq.s32.totalorder %s20, 1
      %p38 = por %p36, %p37
      %p39 = scmp.ne.s32.totalorder %s28, %s29
      %p40 = scmp.eq.s32.totalorder %s20, 0
      %p41 = por %p39, %p40
      %p42 = scmp.ne.s32.totalorder %s28, %s29
      %p43 = scmp.eq.s32.totalorder %s21, 1
      %p44 = por %p42, %p43
      %p46 = scmp.ne.s32.totalorder %s29, %s45
      %p47 = scmp.eq.s32.totalorder %s21, 0
      %p48 = por %p46, %p47
      %s50 = sadd.s32 %s49, 1
      %p53 = scmp.eq.s32.totalorder %s15, 1
      %p54 = scmp.ne.s32.totalorder %s49, %s51
      %p55 = scmp.eq.s32.totalorder %s15, 0
      %p56 = por %p54, %p55
      %p57 = scmp.ne.s32.totalorder %s49, %s51
      %p58 = scmp.eq.s32.totalorder %s20, 1
      %p59 = por %p57, %p58
      %p60 = scmp.ne.s32.totalorder %s51, %s52
      %p61 = scmp.eq.s32.totalorder %s20, 0
      %p62 = por %p60, %p61
      %p63 = scmp.ne.s32.totalorder %s51, %s52
      %p64 = scmp.eq.s32.totalorder %s21, 1
      %p65 = por %p63, %p64
      %p67 = scmp.ne.s32.totalorder %s52, %s66
      %p68 = scmp.eq.s32.totalorder %s21, 0
      %p69 = por %p67, %p68
      %s70 = ssub.s32 %s15, %s22
      %p71 = scmp.eq.s32.totalorder %s70, 0
      %s73 = sadd.s32 %s72, 1
      %s74 = scalar_select %p71, %s72, %s73
      %p77 = pneg %p71
      %p78 = scmp.eq.s32.totalorder %s15, 1
      %p79 = por %p77, %p78
      %p80 = scmp.ne.s32.totalorder %s72, %s75
      %p81 = scmp.eq.s32.totalorder %s15, 0
      %p82 = por %p80, %p81
      %p83 = scmp.ne.s32.totalorder %s72, %s75
      %p84 = scmp.eq.s32.totalorder %s20, 1
      %p85 = por %p83, %p84
      %p86 = scmp.ne.s32.totalorder %s75, %s76
      %p87 = scmp.eq.s32.totalorder %s20, 0
      %p88 = por %p86, %p87
      %p89 = scmp.ne.s32.totalorder %s75, %s76
      %p90 = scmp.eq.s32.totalorder %s21, 1
      %p91 = por %p89, %p90
      %p93 = scmp.ne.s32.totalorder %s76, %s92
      %p94 = scmp.eq.s32.totalorder %s21, 0
      %p95 = por %p93, %p94
      %p96 = scmp.le.s32.totalorder 1, %s15
      %p97 = scmp.lt.s32.totalorder %s15, 3
      %p98 = pnand %p96, %p97
      %p99 = pneg %p98
      // Predicated region
      $region9: #{tpu_custom_call.1} parent=5 // pred_check
        _
      $region10: #{tpu_custom_call.1} parent=5 // pred_check_branch
        %101 = sbr.rel (%p98) target = $region12
      $region11: #{tpu_custom_call.1} parent=5 // pred_region
        %s102 = ssub.s32 %s15, 1
        // Predicated region
        $region13: #{tpu_custom_call.1} parent=11 // pred_check
          %p103 = pneg %p62
        $region14: #{tpu_custom_call.1} parent=11 // pred_check_branch
          %105 = sbr.rel (%p103) target = $region16
        $region15: #{tpu_custom_call.1} parent=11 // pred_region
          %s107 = ssub.s32 4480, 4480
          %108 = vsyncadd [#allocation6], %s107
          %s109 = sshll.u32 [#allocation5], 4
          %s110 = int_to_ptr.vmem [resolvable:$true] %s109
          %115 = dma.hbm_to_vmem [thread:$0]  %s1, 4480, %s110, [#allocation6], 128, 128, 8
        $region16: #{tpu_custom_call.1} parent=11 // pred_fallthru
          _
      $region12: #{tpu_custom_call.1} parent=5 // pred_fallthru
        _
      %p116 = scmp.lt.s32.totalorder %s15, 2
      // Predicated region
      $region17: #{tpu_custom_call.1} parent=5 // pred_check
        %p117 = pneg %p116
      $region18: #{tpu_custom_call.1} parent=5 // pred_check_branch
        %119 = sbr.rel (%p117) target = $region20
      $region19: #{tpu_custom_call.1} parent=5 // pred_region
        // Predicated region
        $region21: #{tpu_custom_call.1} parent=19 // pred_check
          %p120 = pneg %p35
        $region22: #{tpu_custom_call.1} parent=19 // pred_check_branch
          %122 = sbr.rel (%p120) target = $region24
        $region23: #{tpu_custom_call.1} parent=19 // pred_region
          %s123 = sand.u32 %s25, 1
          %s124 = scalar_lea.sflag [#allocation3], %s123
          %s125 = sand.u32 %s25, 1
          %s126 = smul.addr %s125, 64
          %s127 = scalar_lea.vmem [#allocation2], %s126
          %s128 = smul.u32 8, %s15
          %s130 = ssub.s32 1024, 1024
          %131 = vsyncadd %s124, %s130
          %s132 = smul.addr %s128, 128
          %s133 = scalar_lea.hbm %s0, %s132
          %s134 = sshll.u32 %s127, 4
          %s135 = int_to_ptr.vmem [resolvable:$true] %s134
          %140 = dma.hbm_to_vmem [thread:$0]  %s133, 1024, %s135, %s124, 128, 128, 8
        $region24: #{tpu_custom_call.1} parent=19 // pred_fallthru
          _
      $region20: #{tpu_custom_call.1} parent=5 // pred_fallthru
        _
      %p141 = scmp.le.s32.totalorder 1, %s15
      %p142 = scmp.lt.s32.totalorder %s15, 3
      %p143 = pnand %p141, %p142
      %p144 = pneg %p143
      // Predicated region
      $region25: #{tpu_custom_call.1} parent=5 // pred_check
        _
      $region26: #{tpu_custom_call.1} parent=5 // pred_check_branch
        %146 = sbr.rel (%p143) target = $region28
      $region27: #{tpu_custom_call.1} parent=5 // pred_region
        %s147 = ssub.s32 %s15, 1
        %s148 = sand.u32 %s28, 1
        %s149 = scalar_lea.sflag [#allocation3], %s148
        %s150 = sand.u32 %s28, 1
        %s151 = smul.addr %s150, 64
        %s152 = scalar_lea.vmem [#allocation2], %s151
        // Predicated region
        $region29: #{tpu_custom_call.1} parent=27 // pred_check
          %p153 = pneg %p41
        $region30: #{tpu_custom_call.1} parent=27 // pred_check_branch
          %155 = sbr.rel (%p153) target = $region32
        $region31: #{tpu_custom_call.1} parent=27 // pred_region
          %156 = dma.done %s149, 1024
        $region32: #{tpu_custom_call.1} parent=27 // pred_fallthru
          _
        // Predicated region
        $region33: #{tpu_custom_call.1} parent=27 // pred_check
          %p157 = pneg %p62
        $region34: #{tpu_custom_call.1} parent=27 // pred_check_branch
          %159 = sbr.rel (%p157) target = $region36
        $region35: #{tpu_custom_call.1} parent=27 // pred_region
          %160 = dma.done [#allocation6], 4480
        $region36: #{tpu_custom_call.1} parent=27 // pred_fallthru
          _
        %s161 = sand.u32 %s28, 1
        %s162 = scalar_lea.sflag [#allocation3], %s161
        %s163 = sand.u32 %s28, 1
        %s164 = smul.addr %s163, 64
        %s165 = scalar_lea.vmem [#allocation2], %s164
        %p166 = pneg %p41
        %p167 = pneg %p38
        %p168 = pneg %p62
        %p169 = pneg %p59
        %p170 = pneg %p88
        %p171 = pneg %p85
        %s172 = sand.u32 %s75, 1
        %s173 = scalar_lea.sflag [#allocation4], %s172
        %s174 = sand.u32 %s75, 1
        %s175 = smul.addr %s174, 64
        %s176 = scalar_lea.vmem [#allocation7], %s175
        %s177 = smul.u32 8, %s20
        %s178 = smul.u32 8, %s20
        %v179 = vld [vmem:[#allocation5] sm:$0xff]
        %v180 = vld [vmem:[#allocation5 + $0x8] sm:$0xff]
        %v181 = vld [vmem:[#allocation5 + $0x10] sm:$0xff]
        %v182 = vld [vmem:[#allocation5 + $0x18] sm:$0xff]
        %v183 = vld [vmem:[#allocation5 + $0x20] sm:$0xff]
        %v184 = vld [vmem:[#allocation5 + $0x28] sm:$0xff]
        %v185 = vld [vmem:[#allocation5 + $0x30] sm:$0xff]
        %v186 = vld [vmem:[#allocation5 + $0x38] sm:$0xff]
        %v187 = vld [vmem:[#allocation5 + $0x40] sm:$0xff]
        %v188 = vld [vmem:[#allocation5 + $0x48] sm:$0xff]
        %v189 = vld [vmem:[#allocation5 + $0x50] sm:$0xff]
        %v190 = vld [vmem:[#allocation5 + $0x58] sm:$0xff]
        %v191 = vld [vmem:[#allocation5 + $0x60] sm:$0xff]
        %v192 = vld [vmem:[#allocation5 + $0x68] sm:$0xff]
        %v193 = vld [vmem:[#allocation5 + $0x70] sm:$0xff]
        %v194 = vld [vmem:[#allocation5 + $0x78] sm:$0xff]
        %v195 = vld [vmem:[#allocation5 + $0x80] sm:$0xff]
        %v196 = vld [vmem:[#allocation5 + $0x88] sm:$0xff]
        %v197 = vld [vmem:[#allocation5 + $0x90] sm:$0xff]
        %v198 = vld [vmem:[#allocation5 + $0x98] sm:$0xff]
        %v199 = vld [vmem:[#allocation5 + $0xa0] sm:$0xff]
        %v200 = vld [vmem:[#allocation5 + $0xa8] sm:$0xff]
        %v201 = vld [vmem:[#allocation5 + $0xb0] sm:$0xff]
        %v202 = vld [vmem:[#allocation5 + $0xb8] sm:$0xff]
        %v203 = vld [vmem:[#allocation5 + $0xc0] sm:$0xff]
        %v204 = vld [vmem:[#allocation5 + $0xc8] sm:$0xff]
        %v205 = vld [vmem:[#allocation5 + $0xd0] sm:$0xff]
        %v206 = vld [vmem:[#allocation5 + $0xd8] sm:$0xff]
        %v207 = vld [vmem:[#allocation5 + $0xe0] sm:$0xff]
        %v208 = vld [vmem:[#allocation5 + $0xe8] sm:$0xff]
        %v209 = vld [vmem:[#allocation5 + $0xf0] sm:$0xff]
        %v210 = vld [vmem:[#allocation5 + $0xf8] sm:$0xff]
        %v211 = vld [vmem:[#allocation5 + $0x100] sm:$0xff]
        %v212 = vld [vmem:[#allocation5 + $0x108] sm:$0xff]
        %v213 = vld [vmem:[#allocation5 + $0x110] sm:$0xff]
        %v214 = vld [vmem:[%s152] sm:$0xff]
        %v215 = vld [vmem:[%s152 + $0x8] sm:$0xff]
        %v216 = vld [vmem:[%s152 + $0x10] sm:$0xff]
        %v217 = vld [vmem:[%s152 + $0x18] sm:$0xff]
        %v218 = vld [vmem:[%s152 + $0x20] sm:$0xff]
        %v219 = vld [vmem:[%s152 + $0x28] sm:$0xff]
        %v220 = vld [vmem:[%s152 + $0x30] sm:$0xff]
        %v221 = vld [vmem:[%s152 + $0x38] sm:$0xff]
        %vm222 = vcmask 130048
        %v224 = vsel %vm222, %v214, 0
        %v227 = vsel %vm222, %v215, 0
        %v230 = vsel %vm222, %v216, 0
        %v233 = vsel %vm222, %v217, 0
        %v236 = vsel %vm222, %v218, 0
        %v239 = vsel %vm222, %v219, 0
        %v242 = vsel %vm222, %v220, 0
        %v245 = vsel %vm222, %v221, 0
        %247 = vmatprep.subr.mxu0 0.0
        %248 = vmatpush1.msra.mxu0 %v179
        %249 = vmatprep.subr.mxu0 0.0
        %250 = vmatpush1.msra.mxu0 %v180
        %251 = vmatprep.subr.mxu0 0.0
        %252 = vmatpush1.msra.mxu0 0.0
        %253 = vmatprep.subr.mxu0 0.0
        %254 = vmatpush1.msra.mxu0 0.0
        %255 = vmatprep.subr.mxu0 0.0
        %256 = vmatpush1.msra.mxu0 0.0
        %257 = vmatprep.subr.mxu0 0.0
        %258 = vmatpush1.msra.mxu0 0.0
        %259 = vmatprep.subr.mxu0 0.0
        %260 = vmatpush1.msra.mxu0 0.0
        %261 = vmatprep.subr.mxu0 0.0
        %262 = vmatpush1.msra.mxu0 0.0
        %263 = vmatprep.subr.mxu0 0.0
        %264 = vmatpush1.msra.mxu0 0.0
        %265 = vmatprep.subr.mxu0 0.0
        %266 = vmatpush1.msra.mxu0 0.0
        %267 = vmatprep.subr.mxu0 0.0
        %268 = vmatpush1.msra.mxu0 0.0
        %269 = vmatprep.subr.mxu0 0.0
        %270 = vmatpush1.msra.mxu0 0.0
        %271 = vmatprep.subr.mxu0 0.0
        %272 = vmatpush1.msra.mxu0 0.0
        %273 = vmatprep.subr.mxu0 0.0
        %274 = vmatpush1.msra.mxu0 0.0
        %275 = vmatprep.subr.mxu0 0.0
        %276 = vmatpush1.msra.mxu0 0.0
        %277 = vmatprep.subr.mxu0 0.0
        %278 = vmatpush1.msra.mxu0 0.0
        %279 = vmatprep.subr.mxu0 0.0
        %280 = vmatpush1.msra.mxu0 0.0
        %281 = vmatprep.subr.mxu0 0.0
        %282 = vmatpush1.msra.mxu0 0.0
        %283 = vmatprep.subr.mxu0 0.0
        %284 = vmatpush1.msra.mxu0 0.0
        %285 = vmatprep.subr.mxu0 0.0
        %286 = vmatpush1.msra.mxu0 0.0
        %287 = vmatprep.subr.mxu0 0.0
        %288 = vmatpush1.msra.mxu0 0.0
        %289 = vmatprep.subr.mxu0 0.0
        %290 = vmatpush1.msra.mxu0 0.0
        %291 = vmatprep.subr.mxu0 0.0
        %292 = vmatpush1.msra.mxu0 0.0
        %293 = vmatprep.subr.mxu0 0.0
        %294 = vmatpush1.msra.mxu0 0.0
        %295 = vmatprep.subr.mxu0 0.0
        %296 = vmatpush1.msra.mxu0 0.0
        %297 = vmatprep.subr.mxu0 0.0
        %298 = vmatpush1.msra.mxu0 0.0
        %299 = vmatprep.subr.mxu0 0.0
        %300 = vmatpush1.msra.mxu0 0.0
        %301 = vmatprep.subr.mxu0 0.0
        %302 = vmatpush1.msra.mxu0 0.0
        %303 = vmatprep.subr.mxu0 0.0
        %304 = vmatpush1.msra.mxu0 0.0
        %305 = vmatprep.subr.mxu0 0.0
        %306 = vmatpush1.msra.mxu0 0.0
        %307 = vmatprep.subr.mxu0 0.0
        %308 = vmatpush1.msra.mxu0 0.0
        %309 = vmatprep.subr.mxu0 0.0
        %310 = vmatpush1.msra.mxu0 0.0
        %311 = vmatprep.mubr.f32.mxu0 0.0
        %312 = vmatmul.mubr.f32.gmra.mrb[0].mxu0 %v224
        %v313 = vpop.f32.mrb[0].mxu0
        %v314 = vadd.f32 0.0, %v313
        %v315 = vpop.f32.mrb[0].mxu0
        %316 = vmatprep.mubr.f32.mxu0 0.0
        %317 = vmatmul.mubr.f32.gmra.mrb[0].mxu0 %v227
        %v318 = vpop.f32.mrb[0].mxu0
        %v319 = vadd.f32 0.0, %v318
        %v320 = vpop.f32.mrb[0].mxu0
        %321 = vmatprep.mubr.f32.mxu0 0.0
        %322 = vmatmul.mubr.f32.gmra.mrb[0].mxu0 %v230
        %v323 = vpop.f32.mrb[0].mxu0
        %v324 = vadd.f32 0.0, %v323
        %v325 = vpop.f32.mrb[0].mxu0
        %326 = vmatprep.mubr.f32.mxu0 0.0
        %327 = vmatmul.mubr.f32.gmra.mrb[0].mxu0 %v233
        %v328 = vpop.f32.mrb[0].mxu0
        %v329 = vadd.f32 0.0, %v328
        %v330 = vpop.f32.mrb[0].mxu0
        %331 = vmatprep.mubr.f32.mxu0 0.0
        %332 = vmatmul.mubr.f32.gmra.mrb[0].mxu0 %v236
        %v333 = vpop.f32.mrb[0].mxu0
        %v334 = vadd.f32 0.0, %v333
        %v335 = vpop.f32.mrb[0].mxu0
        %336 = vmatprep.mubr.f32.mxu0 0.0
        %337 = vmatmul.mubr.f32.gmra.mrb[0].mxu0 %v239
        %v338 = vpop.f32.mrb[0].mxu0
        %v339 = vadd.f32 0.0, %v338
        %v340 = vpop.f32.mrb[0].mxu0
        %341 = vmatprep.mubr.f32.mxu0 0.0
        %342 = vmatmul.mubr.f32.gmra.mrb[0].mxu0 %v242
        %v343 = vpop.f32.mrb[0].mxu0
        %v344 = vadd.f32 0.0, %v343
        %v345 = vpop.f32.mrb[0].mxu0
        %346 = vmatprep.mubr.f32.mxu0 0.0
        %347 = vmatmul.mubr.f32.gmra.mrb[0].mxu0 %v245
        %v348 = vpop.f32.mrb[0].mxu0
        %v349 = vadd.f32 0.0, %v348
        %v350 = vpop.f32.mrb[0].mxu0
        %351 = vdwg.mxu0
        %v352 = vrot.slane %v314, 4
        %v353 = vadd.f32 %v314, %v352
        %v354 = vrot.slane %v353, 2
        %v355 = vadd.f32 %v353, %v354
        %v356 = vrot.slane %v355, 1
        %v357 = vadd.f32 %v355, %v356
        %v358 = vrot.slane %v319, 4
        %v359 = vadd.f32 %v319, %v358
        %v360 = vrot.slane %v359, 2
        %v361 = vadd.f32 %v359, %v360
        %v362 = vrot.slane %v361, 1
        %v363 = vadd.f32 %v361, %v362
        %v364 = vrot.slane %v324, 4
        %v365 = vadd.f32 %v324, %v364
        %v366 = vrot.slane %v365, 2
        %v367 = vadd.f32 %v365, %v366
        %v368 = vrot.slane %v367, 1
        %v369 = vadd.f32 %v367, %v368
        %v370 = vrot.slane %v329, 4
        %v371 = vadd.f32 %v329, %v370
        %v372 = vrot.slane %v371, 2
        %v373 = vadd.f32 %v371, %v372
        %v374 = vrot.slane %v373, 1
        %v375 = vadd.f32 %v373, %v374
        %v376 = vrot.slane %v334, 4
        %v377 = vadd.f32 %v334, %v376
        %v378 = vrot.slane %v377, 2
        %v379 = vadd.f32 %v377, %v378
        %v380 = vrot.slane %v379, 1
        %v381 = vadd.f32 %v379, %v380
        %v382 = vrot.slane %v339, 4
        %v383 = vadd.f32 %v339, %v382
        %v384 = vrot.slane %v383, 2
        %v385 = vadd.f32 %v383, %v384
        %v386 = vrot.slane %v385, 1
        %v387 = vadd.f32 %v385, %v386
        %v388 = vrot.slane %v344, 4
        %v389 = vadd.f32 %v344, %v388
        %v390 = vrot.slane %v389, 2
        %v391 = vadd.f32 %v389, %v390
        %v392 = vrot.slane %v391, 1
        %v393 = vadd.f32 %v391, %v392
        %v394 = vrot.slane %v349, 4
        %v395 = vadd.f32 %v349, %v394
        %v396 = vrot.slane %v395, 2
        %v397 = vadd.f32 %v395, %v396
        %v398 = vrot.slane %v397, 1
        %v399 = vadd.f32 %v397, %v398
        %v400 = vrcp.pop 8.0
        %v401 = vmul.f32 %v357, %v400
        %v402 = vmul.f32 %v363, %v400
        %v403 = vmul.f32 %v369, %v400
        %v404 = vmul.f32 %v375, %v400
        %v405 = vmul.f32 %v381, %v400
        %v406 = vmul.f32 %v387, %v400
        %v407 = vmul.f32 %v393, %v400
        %v408 = vmul.f32 %v399, %v400
        %v409 = vsub.f32 %v314, %v401
        %v410 = vsub.f32 %v319, %v402
        %v411 = vsub.f32 %v324, %v403
        %v412 = vsub.f32 %v329, %v404
        %v413 = vsub.f32 %v334, %v405
        %v414 = vsub.f32 %v339, %v406
        %v415 = vsub.f32 %v344, %v407
        %v416 = vsub.f32 %v349, %v408
        %v417 = vmul.f32 %v409, %v409
        %v418 = vmul.f32 %v410, %v410
        %v419 = vmul.f32 %v411, %v411
        %v420 = vmul.f32 %v412, %v412
        %v421 = vmul.f32 %v413, %v413
        %v422 = vmul.f32 %v414, %v414
        %v423 = vmul.f32 %v415, %v415
        %v424 = vmul.f32 %v416, %v416
        %v425 = vrot.slane %v417, 4
        %v426 = vadd.f32 %v417, %v425
        %v427 = vrot.slane %v426, 2
        %v428 = vadd.f32 %v426, %v427
        %v429 = vrot.slane %v428, 1
        %v430 = vadd.f32 %v428, %v429
        %v431 = vrot.slane %v418, 4
        %v432 = vadd.f32 %v418, %v431
        %v433 = vrot.slane %v432, 2
        %v434 = vadd.f32 %v432, %v433
        %v435 = vrot.slane %v434, 1
        %v436 = vadd.f32 %v434, %v435
        %v437 = vrot.slane %v419, 4
        %v438 = vadd.f32 %v419, %v437
        %v439 = vrot.slane %v438, 2
        %v440 = vadd.f32 %v438, %v439
        %v441 = vrot.slane %v440, 1
        %v442 = vadd.f32 %v440, %v441
        %v443 = vrot.slane %v420, 4
        %v444 = vadd.f32 %v420, %v443
        %v445 = vrot.slane %v444, 2
        %v446 = vadd.f32 %v444, %v445
        %v447 = vrot.slane %v446, 1
        %v448 = vadd.f32 %v446, %v447
        %v449 = vrot.slane %v421, 4
        %v450 = vadd.f32 %v421, %v449
        %v451 = vrot.slane %v450, 2
        %v452 = vadd.f32 %v450, %v451
        %v453 = vrot.slane %v452, 1
        %v454 = vadd.f32 %v452, %v453
        %v455 = vrot.slane %v422, 4
        %v456 = vadd.f32 %v422, %v455
        %v457 = vrot.slane %v456, 2
        %v458 = vadd.f32 %v456, %v457
        %v459 = vrot.slane %v458, 1
        %v460 = vadd.f32 %v458, %v459
        %v461 = vrot.slane %v423, 4
        %v462 = vadd.f32 %v423, %v461
        %v463 = vrot.slane %v462, 2
        %v464 = vadd.f32 %v462, %v463
        %v465 = vrot.slane %v464, 1
        %v466 = vadd.f32 %v464, %v465
        %v467 = vrot.slane %v424, 4
        %v468 = vadd.f32 %v424, %v467
        %v469 = vrot.slane %v468, 2
        %v470 = vadd.f32 %v468, %v469
        %v471 = vrot.slane %v470, 1
        %v472 = vadd.f32 %v470, %v471
        %v473 = vmul.f32 %v430, %v400
        %v474 = vmul.f32 %v436, %v400
        %v475 = vmul.f32 %v442, %v400
        %v476 = vmul.f32 %v448, %v400
        %v477 = vmul.f32 %v454, %v400
        %v478 = vmul.f32 %v460, %v400
        %v479 = vmul.f32 %v466, %v400
        %v480 = vmul.f32 %v472, %v400
        %v481 = vadd.f32 %v473, 1e-05
        %v482 = vadd.f32 %v474, 1e-05
        %v483 = vadd.f32 %v475, 1e-05
        %v484 = vadd.f32 %v476, 1e-05
        %v485 = vadd.f32 %v477, 1e-05
        %v486 = vadd.f32 %v478, 1e-05
        %v487 = vadd.f32 %v479, 1e-05
        %v488 = vadd.f32 %v480, 1e-05
        %v489 = vrsqrt.pop %v481
        %v490 = vrsqrt.pop %v482
        %v491 = vrsqrt.pop %v483
        %v492 = vrsqrt.pop %v484
        %v493 = vrsqrt.pop %v485
        %v494 = vrsqrt.pop %v486
        %v495 = vrsqrt.pop %v487
        %v496 = vrsqrt.pop %v488
        %v497 = vmul.f32 %v409, %v489
        %v498 = vmul.f32 %v410, %v490
        %v499 = vmul.f32 %v411, %v491
        %v500 = vmul.f32 %v412, %v492
        %v501 = vmul.f32 %v413, %v493
        %v502 = vmul.f32 %v414, %v494
        %v503 = vmul.f32 %v415, %v495
        %v504 = vmul.f32 %v416, %v496
        %v505 = vlaneseq
        %v506 = vshrl.u32 %v505, 7
        %v507 = vsub.s32 0, %v506
        %v508 = vrot.slane %v181, %v507
        %v509 = vmul.f32 %v497, %v508
        %v510 = vmul.f32 %v498, %v508
        %v511 = vmul.f32 %v499, %v508
        %v512 = vmul.f32 %v500, %v508
        %v513 = vmul.f32 %v501, %v508
        %v514 = vmul.f32 %v502, %v508
        %v515 = vmul.f32 %v503, %v508
        %v516 = vmul.f32 %v504, %v508
        %v517 = vlaneseq
        %v518 = vshrl.u32 %v517, 7
        %v519 = vsub.s32 1, %v518
        %v520 = vrot.slane %v181, %v519
        %v521 = vadd.f32 %v509, %v520
        %v522 = vadd.f32 %v510, %v520
        %v523 = vadd.f32 %v511, %v520
        %v524 = vadd.f32 %v512, %v520
        %v525 = vadd.f32 %v513, %v520
        %v526 = vadd.f32 %v514, %v520
        %v527 = vadd.f32 %v515, %v520
        %v528 = vadd.f32 %v516, %v520
        %v529 = vmul.f32 %v521, 0.01
        %v530 = vmul.f32 %v522, 0.01
        %v531 = vmul.f32 %v523, 0.01
        %v532 = vmul.f32 %v524, 0.01
        %v533 = vmul.f32 %v525, 0.01
        %v534 = vmul.f32 %v526, 0.01
        %v535 = vmul.f32 %v527, 0.01
        %v536 = vmul.f32 %v528, 0.01
        %v537 = vmax.f32 %v521, %v529
        %v538 = vmax.f32 %v522, %v530
        %v539 = vmax.f32 %v523, %v531
        %v540 = vmax.f32 %v524, %v532
        %v541 = vmax.f32 %v525, %v533
        %v542 = vmax.f32 %v526, %v534
        %v543 = vmax.f32 %v527, %v535
        %v544 = vmax.f32 %v528, %v536
        %545 = vmatprep.subr.mxu0 0.0
        %546 = vmatpush1.msra.mxu0 %v182
        %547 = vmatprep.subr.mxu0 0.0
        %548 = vmatpush1.msra.mxu0 %v183
        %549 = vmatprep.subr.mxu0 0.0
        %550 = vmatpush1.msra.mxu0 %v184
        %551 = vmatprep.subr.mxu0 0.0
        %552 = vmatpush1.msra.mxu0 %v185
        %553 = vmatprep.subr.mxu0 0.0
        %554 = vmatpush1.msra.mxu0 %v186
        %555 = vmatprep.subr.mxu0 0.0
        %556 = vmatpush1.msra.mxu0 %v187
        %557 = vmatprep.subr.mxu0 0.0
        %558 = vmatpush1.msra.mxu0 %v188
        %559 = vmatprep.subr.mxu0 0.0
        %560 = vmatpush1.msra.mxu0 %v189
        %561 = vmatprep.subr.mxu0 0.0
        %562 = vmatpush1.msra.mxu0 %v190
        %563 = vmatprep.subr.mxu0 0.0
        %564 = vmatpush1.msra.mxu0 %v191
        %565 = vmatprep.subr.mxu0 0.0
        %566 = vmatpush1.msra.mxu0 %v192
        %567 = vmatprep.subr.mxu0 0.0
        %568 = vmatpush1.msra.mxu0 %v193
        %569 = vmatprep.subr.mxu0 0.0
        %570 = vmatpush1.msra.mxu0 %v194
        %571 = vmatprep.subr.mxu0 0.0
        %572 = vmatpush1.msra.mxu0 %v195
        %573 = vmatprep.subr.mxu0 0.0
        %574 = vmatpush1.msra.mxu0 %v196
        %575 = vmatprep.subr.mxu0 0.0
        %576 = vmatpush1.msra.mxu0 %v197
        %577 = vmatprep.subr.mxu0 0.0
        %578 = vmatpush1.msra.mxu0 0.0
        %579 = vmatprep.subr.mxu0 0.0
        %580 = vmatpush1.msra.mxu0 0.0
        %581 = vmatprep.subr.mxu0 0.0
        %582 = vmatpush1.msra.mxu0 0.0
        %583 = vmatprep.subr.mxu0 0.0
        %584 = vmatpush1.msra.mxu0 0.0
        %585 = vmatprep.subr.mxu0 0.0
        %586 = vmatpush1.msra.mxu0 0.0
        %587 = vmatprep.subr.mxu0 0.0
        %588 = vmatpush1.msra.mxu0 0.0
        %589 = vmatprep.subr.mxu0 0.0
        %590 = vmatpush1.msra.mxu0 0.0
        %591 = vmatprep.subr.mxu0 0.0
        %592 = vmatpush1.msra.mxu0 0.0
        %593 = vmatprep.subr.mxu0 0.0
        %594 = vmatpush1.msra.mxu0 0.0
        %595 = vmatprep.subr.mxu0 0.0
        %596 = vmatpush1.msra.mxu0 0.0
        %597 = vmatprep.subr.mxu0 0.0
        %598 = vmatpush1.msra.mxu0 0.0
        %599 = vmatprep.subr.mxu0 0.0
        %600 = vmatpush1.msra.mxu0 0.0
        %601 = vmatprep.subr.mxu0 0.0
        %602 = vmatpush1.msra.mxu0 0.0
        %603 = vmatprep.subr.mxu0 0.0
        %604 = vmatpush1.msra.mxu0 0.0
        %605 = vmatprep.subr.mxu0 0.0
        %606 = vmatpush1.msra.mxu0 0.0
        %607 = vmatprep.subr.mxu0 0.0
        %608 = vmatpush1.msra.mxu0 0.0
        %609 = vmatprep.mubr.f32.mxu0 0.0
        %610 = vmatmul.mubr.f32.gmra.mrb[0].mxu0 %v537
        %v611 = vpop.f32.mrb[0].mxu0
        %v612 = vadd.f32 0.0, %v611
        %v613 = vpop.f32.mrb[0].mxu0
        %614 = vmatprep.mubr.f32.mxu0 0.0
        %615 = vmatmul.mubr.f32.gmra.mrb[0].mxu0 %v538
        %v616 = vpop.f32.mrb[0].mxu0
        %v617 = vadd.f32 0.0, %v616
        %v618 = vpop.f32.mrb[0].mxu0
        %619 = vmatprep.mubr.f32.mxu0 0.0
        %620 = vmatmul.mubr.f32.gmra.mrb[0].mxu0 %v539
        %v621 = vpop.f32.mrb[0].mxu0
        %v622 = vadd.f32 0.0, %v621
        %v623 = vpop.f32.mrb[0].mxu0
        %624 = vmatprep.mubr.f32.mxu0 0.0
        %625 = vmatmul.mubr.f32.gmra.mrb[0].mxu0 %v540
        %v626 = vpop.f32.mrb[0].mxu0
        %v627 = vadd.f32 0.0, %v626
        %v628 = vpop.f32.mrb[0].mxu0
        %629 = vmatprep.mubr.f32.mxu0 0.0
        %630 = vmatmul.mubr.f32.gmra.mrb[0].mxu0 %v541
        %v631 = vpop.f32.mrb[0].mxu0
        %v632 = vadd.f32 0.0, %v631
        %v633 = vpop.f32.mrb[0].mxu0
        %634 = vmatprep.mubr.f32.mxu0 0.0
        %635 = vmatmul.mubr.f32.gmra.mrb[0].mxu0 %v542
        %v636 = vpop.f32.mrb[0].mxu0
        %v637 = vadd.f32 0.0, %v636
        %v638 = vpop.f32.mrb[0].mxu0
        %639 = vmatprep.mubr.f32.mxu0 0.0
        %640 = vmatmul.mubr.f32.gmra.mrb[0].mxu0 %v543
        %v641 = vpop.f32.mrb[0].mxu0
        %v642 = vadd.f32 0.0, %v641
        %v643 = vpop.f32.mrb[0].mxu0
        %644 = vmatprep.mubr.f32.mxu0 0.0
        %645 = vmatmul.mubr.f32.gmra.mrb[0].mxu0 %v544
        %v646 = vpop.f32.mrb[0].mxu0
        %v647 = vadd.f32 0.0, %v646
        %v648 = vpop.f32.mrb[0].mxu0
        %649 = vdwg.mxu0
        %v650 = vrot.slane %v612, 4
        %v651 = vadd.f32 %v612, %v650
        %v652 = vrot.slane %v651, 2
        %v653 = vadd.f32 %v651, %v652
        %v654 = vrot.slane %v653, 1
        %v655 = vadd.f32 %v653, %v654
        %v656 = vrot.slane %v617, 4
        %v657 = vadd.f32 %v617, %v656
        %v658 = vrot.slane %v657, 2
        %v659 = vadd.f32 %v657, %v658
        %v660 = vrot.slane %v659, 1
        %v661 = vadd.f32 %v659, %v660
        %v662 = vrot.slane %v622, 4
        %v663 = vadd.f32 %v622, %v662
        %v664 = vrot.slane %v663, 2
        %v665 = vadd.f32 %v663, %v664
        %v666 = vrot.slane %v665, 1
        %v667 = vadd.f32 %v665, %v666
        %v668 = vrot.slane %v627, 4
        %v669 = vadd.f32 %v627, %v668
        %v670 = vrot.slane %v669, 2
        %v671 = vadd.f32 %v669, %v670
        %v672 = vrot.slane %v671, 1
        %v673 = vadd.f32 %v671, %v672
        %v674 = vrot.slane %v632, 4
        %v675 = vadd.f32 %v632, %v674
        %v676 = vrot.slane %v675, 2
        %v677 = vadd.f32 %v675, %v676
        %v678 = vrot.slane %v677, 1
        %v679 = vadd.f32 %v677, %v678
        %v680 = vrot.slane %v637, 4
        %v681 = vadd.f32 %v637, %v680
        %v682 = vrot.slane %v681, 2
        %v683 = vadd.f32 %v681, %v682
        %v684 = vrot.slane %v683, 1
        %v685 = vadd.f32 %v683, %v684
        %v686 = vrot.slane %v642, 4
        %v687 = vadd.f32 %v642, %v686
        %v688 = vrot.slane %v687, 2
        %v689 = vadd.f32 %v687, %v688
        %v690 = vrot.slane %v689, 1
        %v691 = vadd.f32 %v689, %v690
        %v692 = vrot.slane %v647, 4
        %v693 = vadd.f32 %v647, %v692
        %v694 = vrot.slane %v693, 2
        %v695 = vadd.f32 %v693, %v694
        %v696 = vrot.slane %v695, 1
        %v697 = vadd.f32 %v695, %v696
        %v698 = vmul.f32 %v655, %v400
        %v699 = vmul.f32 %v661, %v400
        %v700 = vmul.f32 %v667, %v400
        %v701 = vmul.f32 %v673, %v400
        %v702 = vmul.f32 %v679, %v400
        %v703 = vmul.f32 %v685, %v400
        %v704 = vmul.f32 %v691, %v400
        %v705 = vmul.f32 %v697, %v400
        %v706 = vsub.f32 %v612, %v698
        %v707 = vsub.f32 %v617, %v699
        %v708 = vsub.f32 %v622, %v700
        %v709 = vsub.f32 %v627, %v701
        %v710 = vsub.f32 %v632, %v702
        %v711 = vsub.f32 %v637, %v703
        %v712 = vsub.f32 %v642, %v704
        %v713 = vsub.f32 %v647, %v705
        %v714 = vmul.f32 %v706, %v706
        %v715 = vmul.f32 %v707, %v707
        %v716 = vmul.f32 %v708, %v708
        %v717 = vmul.f32 %v709, %v709
        %v718 = vmul.f32 %v710, %v710
        %v719 = vmul.f32 %v711, %v711
        %v720 = vmul.f32 %v712, %v712
        %v721 = vmul.f32 %v713, %v713
        %v722 = vrot.slane %v714, 4
        %v723 = vadd.f32 %v714, %v722
        %v724 = vrot.slane %v723, 2
        %v725 = vadd.f32 %v723, %v724
        %v726 = vrot.slane %v725, 1
        %v727 = vadd.f32 %v725, %v726
        %v728 = vrot.slane %v715, 4
        %v729 = vadd.f32 %v715, %v728
        %v730 = vrot.slane %v729, 2
        %v731 = vadd.f32 %v729, %v730
        %v732 = vrot.slane %v731, 1
        %v733 = vadd.f32 %v731, %v732
        %v734 = vrot.slane %v716, 4
        %v735 = vadd.f32 %v716, %v734
        %v736 = vrot.slane %v735, 2
        %v737 = vadd.f32 %v735, %v736
        %v738 = vrot.slane %v737, 1
        %v739 = vadd.f32 %v737, %v738
        %v740 = vrot.slane %v717, 4
        %v741 = vadd.f32 %v717, %v740
        %v742 = vrot.slane %v741, 2
        %v743 = vadd.f32 %v741, %v742
        %v744 = vrot.slane %v743, 1
        %v745 = vadd.f32 %v743, %v744
        %v746 = vrot.slane %v718, 4
        %v747 = vadd.f32 %v718, %v746
        %v748 = vrot.slane %v747, 2
        %v749 = vadd.f32 %v747, %v748
        %v750 = vrot.slane %v749, 1
        %v751 = vadd.f32 %v749, %v750
        %v752 = vrot.slane %v719, 4
        %v753 = vadd.f32 %v719, %v752
        %v754 = vrot.slane %v753, 2
        %v755 = vadd.f32 %v753, %v754
        %v756 = vrot.slane %v755, 1
        %v757 = vadd.f32 %v755, %v756
        %v758 = vrot.slane %v720, 4
        %v759 = vadd.f32 %v720, %v758
        %v760 = vrot.slane %v759, 2
        %v761 = vadd.f32 %v759, %v760
        %v762 = vrot.slane %v761, 1
        %v763 = vadd.f32 %v761, %v762
        %v764 = vrot.slane %v721, 4
        %v765 = vadd.f32 %v721, %v764
        %v766 = vrot.slane %v765, 2
        %v767 = vadd.f32 %v765, %v766
        %v768 = vrot.slane %v767, 1
        %v769 = vadd.f32 %v767, %v768
        %v770 = vmul.f32 %v727, %v400
        %v771 = vmul.f32 %v733, %v400
        %v772 = vmul.f32 %v739, %v400
        %v773 = vmul.f32 %v745, %v400
        %v774 = vmul.f32 %v751, %v400
        %v775 = vmul.f32 %v757, %v400
        %v776 = vmul.f32 %v763, %v400
        %v777 = vmul.f32 %v769, %v400
        %v778 = vadd.f32 %v770, 1e-05
        %v779 = vadd.f32 %v771, 1e-05
        %v780 = vadd.f32 %v772, 1e-05
        %v781 = vadd.f32 %v773, 1e-05
        %v782 = vadd.f32 %v774, 1e-05
        %v783 = vadd.f32 %v775, 1e-05
        %v784 = vadd.f32 %v776, 1e-05
        %v785 = vadd.f32 %v777, 1e-05
        %v786 = vrsqrt.pop %v778
        %v787 = vrsqrt.pop %v779
        %v788 = vrsqrt.pop %v780
        %v789 = vrsqrt.pop %v781
        %v790 = vrsqrt.pop %v782
        %v791 = vrsqrt.pop %v783
        %v792 = vrsqrt.pop %v784
        %v793 = vrsqrt.pop %v785
        %v794 = vmul.f32 %v706, %v786
        %v795 = vmul.f32 %v707, %v787
        %v796 = vmul.f32 %v708, %v788
        %v797 = vmul.f32 %v709, %v789
        %v798 = vmul.f32 %v710, %v790
        %v799 = vmul.f32 %v711, %v791
        %v800 = vmul.f32 %v712, %v792
        %v801 = vmul.f32 %v713, %v793
        %v802 = vlaneseq
        %v803 = vshrl.u32 %v802, 7
        %v804 = vsub.s32 2, %v803
        %v805 = vrot.slane %v181, %v804
        %v806 = vmul.f32 %v794, %v805
        %v807 = vmul.f32 %v795, %v805
        %v808 = vmul.f32 %v796, %v805
        %v809 = vmul.f32 %v797, %v805
        %v810 = vmul.f32 %v798, %v805
        %v811 = vmul.f32 %v799, %v805
        %v812 = vmul.f32 %v800, %v805
        %v813 = vmul.f32 %v801, %v805
        %v814 = vlaneseq
        %v815 = vshrl.u32 %v814, 7
        %v816 = vsub.s32 3, %v815
        %v817 = vrot.slane %v181, %v816
        %v818 = vadd.f32 %v806, %v817
        %v819 = vadd.f32 %v807, %v817
        %v820 = vadd.f32 %v808, %v817
        %v821 = vadd.f32 %v809, %v817
        %v822 = vadd.f32 %v810, %v817
        %v823 = vadd.f32 %v811, %v817
        %v824 = vadd.f32 %v812, %v817
        %v825 = vadd.f32 %v813, %v817
        %v826 = vmul.f32 %v818, 0.01
        %v827 = vmul.f32 %v819, 0.01
        %v828 = vmul.f32 %v820, 0.01
        %v829 = vmul.f32 %v821, 0.01
        %v830 = vmul.f32 %v822, 0.01
        %v831 = vmul.f32 %v823, 0.01
        %v832 = vmul.f32 %v824, 0.01
        %v833 = vmul.f32 %v825, 0.01
        %v834 = vmax.f32 %v818, %v826
        %v835 = vmax.f32 %v819, %v827
        %v836 = vmax.f32 %v820, %v828
        %v837 = vmax.f32 %v821, %v829
        %v838 = vmax.f32 %v822, %v830
        %v839 = vmax.f32 %v823, %v831
        %v840 = vmax.f32 %v824, %v832
        %v841 = vmax.f32 %v825, %v833
        %v842 = vlaneseq
        %v843 = vshrl.u32 %v842, 7
        %v844 = vsub.s32 4, %v843
        %v845 = vrot.slane %v181, %v844
        %846 = vmatprep.subr.mxu0 0.0
        %847 = vmatpush1.msra.mxu0 %v198
        %848 = vmatprep.subr.mxu0 0.0
        %849 = vmatpush1.msra.mxu0 %v199
        %850 = vmatprep.subr.mxu0 0.0
        %851 = vmatpush1.msra.mxu0 %v200
        %852 = vmatprep.subr.mxu0 0.0
        %853 = vmatpush1.msra.mxu0 %v201
        %854 = vmatprep.subr.mxu0 0.0
        %855 = vmatpush1.msra.mxu0 %v202
        %856 = vmatprep.subr.mxu0 0.0
        %857 = vmatpush1.msra.mxu0 %v203
        %858 = vmatprep.subr.mxu0 0.0
        %859 = vmatpush1.msra.mxu0 %v204
        %860 = vmatprep.subr.mxu0 0.0
        %861 = vmatpush1.msra.mxu0 %v205
        %862 = vmatprep.subr.mxu0 0.0
        %863 = vmatpush1.msra.mxu0 %v206
        %864 = vmatprep.subr.mxu0 0.0
        %865 = vmatpush1.msra.mxu0 %v207
        %866 = vmatprep.subr.mxu0 0.0
        %867 = vmatpush1.msra.mxu0 %v208
        %868 = vmatprep.subr.mxu0 0.0
        %869 = vmatpush1.msra.mxu0 %v209
        %870 = vmatprep.subr.mxu0 0.0
        %871 = vmatpush1.msra.mxu0 %v210
        %872 = vmatprep.subr.mxu0 0.0
        %873 = vmatpush1.msra.mxu0 %v211
        %874 = vmatprep.subr.mxu0 0.0
        %875 = vmatpush1.msra.mxu0 %v212
        %876 = vmatprep.subr.mxu0 0.0
        %877 = vmatpush1.msra.mxu0 %v213
        %878 = vmatprep.subr.mxu0 0.0
        %879 = vmatpush1.msra.mxu0 0.0
        %880 = vmatprep.subr.mxu0 0.0
        %881 = vmatpush1.msra.mxu0 0.0
        %882 = vmatprep.subr.mxu0 0.0
        %883 = vmatpush1.msra.mxu0 0.0
        %884 = vmatprep.subr.mxu0 0.0
        %885 = vmatpush1.msra.mxu0 0.0
        %886 = vmatprep.subr.mxu0 0.0
        %887 = vmatpush1.msra.mxu0 0.0
        %888 = vmatprep.subr.mxu0 0.0
        %889 = vmatpush1.msra.mxu0 0.0
        %890 = vmatprep.subr.mxu0 0.0
        %891 = vmatpush1.msra.mxu0 0.0
        %892 = vmatprep.subr.mxu0 0.0
        %893 = vmatpush1.msra.mxu0 0.0
        %894 = vmatprep.subr.mxu0 0.0
        %895 = vmatpush1.msra.mxu0 0.0
        %896 = vmatprep.subr.mxu0 0.0
        %897 = vmatpush1.msra.mxu0 0.0
        %898 = vmatprep.subr.mxu0 0.0
        %899 = vmatpush1.msra.mxu0 0.0
        %900 = vmatprep.subr.mxu0 0.0
        %901 = vmatpush1.msra.mxu0 0.0
        %902 = vmatprep.subr.mxu0 0.0
        %903 = vmatpush1.msra.mxu0 0.0
        %904 = vmatprep.subr.mxu0 0.0
        %905 = vmatpush1.msra.mxu0 0.0
        %906 = vmatprep.subr.mxu0 0.0
        %907 = vmatpush1.msra.mxu0 0.0
        %908 = vmatprep.subr.mxu0 0.0
        %909 = vmatpush1.msra.mxu0 0.0
        %910 = vmatprep.mubr.f32.mxu0 0.0
        %911 = vmatmul.mubr.f32.gmra.mrb[0].mxu0 %v834
        %v912 = vpop.f32.mrb[0].mxu0
        %v913 = vadd.f32 %v845, %v912
        %v914 = vpop.f32.mrb[0].mxu0
        %915 = vmatprep.mubr.f32.mxu0 0.0
        %916 = vmatmul.mubr.f32.gmra.mrb[0].mxu0 %v835
        %v917 = vpop.f32.mrb[0].mxu0
        %v918 = vadd.f32 %v845, %v917
        %v919 = vpop.f32.mrb[0].mxu0
        %920 = vmatprep.mubr.f32.mxu0 0.0
        %921 = vmatmul.mubr.f32.gmra.mrb[0].mxu0 %v836
        %v922 = vpop.f32.mrb[0].mxu0
        %v923 = vadd.f32 %v845, %v922
        %v924 = vpop.f32.mrb[0].mxu0
        %925 = vmatprep.mubr.f32.mxu0 0.0
        %926 = vmatmul.mubr.f32.gmra.mrb[0].mxu0 %v837
        %v927 = vpop.f32.mrb[0].mxu0
        %v928 = vadd.f32 %v845, %v927
        %v929 = vpop.f32.mrb[0].mxu0
        %930 = vmatprep.mubr.f32.mxu0 0.0
        %931 = vmatmul.mubr.f32.gmra.mrb[0].mxu0 %v838
        %v932 = vpop.f32.mrb[0].mxu0
        %v933 = vadd.f32 %v845, %v932
        %v934 = vpop.f32.mrb[0].mxu0
        %935 = vmatprep.mubr.f32.mxu0 0.0
        %936 = vmatmul.mubr.f32.gmra.mrb[0].mxu0 %v839
        %v937 = vpop.f32.mrb[0].mxu0
        %v938 = vadd.f32 %v845, %v937
        %v939 = vpop.f32.mrb[0].mxu0
        %940 = vmatprep.mubr.f32.mxu0 0.0
        %941 = vmatmul.mubr.f32.gmra.mrb[0].mxu0 %v840
        %v942 = vpop.f32.mrb[0].mxu0
        %v943 = vadd.f32 %v845, %v942
        %v944 = vpop.f32.mrb[0].mxu0
        %945 = vmatprep.mubr.f32.mxu0 0.0
        %946 = vmatmul.mubr.f32.gmra.mrb[0].mxu0 %v841
        %v947 = vpop.f32.mrb[0].mxu0
        %v948 = vadd.f32 %v845, %v947
        %v949 = vpop.f32.mrb[0].mxu0
        %950 = vdwg.mxu0
        %v951 = vtanh.pop %v913
        %v952 = vtanh.pop %v918
        %v953 = vtanh.pop %v923
        %v954 = vtanh.pop %v928
        %v955 = vtanh.pop %v933
        %v956 = vtanh.pop %v938
        %v957 = vtanh.pop %v943
        %v958 = vtanh.pop %v948
        %959 = vst [vmem:[%s176] sm:$0xff] %v951
        %960 = vst [vmem:[%s176 + $0x8] sm:$0xff] %v952
        %961 = vst [vmem:[%s176 + $0x10] sm:$0xff] %v953
        %962 = vst [vmem:[%s176 + $0x18] sm:$0xff] %v954
        %963 = vst [vmem:[%s176 + $0x20] sm:$0xff] %v955
        %964 = vst [vmem:[%s176 + $0x28] sm:$0xff] %v956
        %965 = vst [vmem:[%s176 + $0x30] sm:$0xff] %v957
        %966 = vst [vmem:[%s176 + $0x38] sm:$0xff] %v958
        %s967 = sand.u32 %s75, 1
        %s968 = scalar_lea.sflag [#allocation4], %s967
        %s969 = sand.u32 %s75, 1
        %s970 = smul.addr %s969, 64
        %s971 = scalar_lea.vmem [#allocation7], %s970
        // Predicated region
        $region37: #{tpu_custom_call.1} parent=27 // pred_check
          %p972 = pneg %p85
        $region38: #{tpu_custom_call.1} parent=27 // pred_check_branch
          %974 = sbr.rel (%p972) target = $region40
        $region39: #{tpu_custom_call.1} parent=27 // pred_region
          %s975 = smul.u32 8, %s20
          %s977 = ssub.s32 1024, 1024
          %978 = vsyncadd %s968, %s977
          %s979 = smul.addr %s975, 128
          %s980 = scalar_lea.hbm %s2, %s979
          %s981 = sshll.u32 %s971, 4
          %s982 = int_to_ptr.vmem [resolvable:$true] %s981
          %987 = dma.vmem_to_hbm [thread:$0]  %s982, 1024, %s980, %s968, 128, 128, 8
        $region40: #{tpu_custom_call.1} parent=27 // pred_fallthru
          _
      $region28: #{tpu_custom_call.1} parent=5 // pred_fallthru
        _
      %p988 = scmp.le.s32.totalorder 2, %s15
      // Predicated region
      $region41: #{tpu_custom_call.1} parent=5 // pred_check
        %p989 = pneg %p988
      $region42: #{tpu_custom_call.1} parent=5 // pred_check_branch
        %991 = sbr.rel (%p989) target = $region44
      $region43: #{tpu_custom_call.1} parent=5 // pred_region
        %s992 = ssub.s32 %s15, 2
        // Predicated region
        $region45: #{tpu_custom_call.1} parent=43 // pred_check
          %p993 = pneg %p91
        $region46: #{tpu_custom_call.1} parent=43 // pred_check_branch
          %995 = sbr.rel (%p993) target = $region48
        $region47: #{tpu_custom_call.1} parent=43 // pred_region
          %s996 = sand.u32 %s76, 1
          %s997 = scalar_lea.sflag [#allocation4], %s996
          %s998 = sand.u32 %s76, 1
          %s999 = smul.addr %s998, 64
          %s1000 = scalar_lea.vmem [#allocation7], %s999
          %1001 = dma.done %s997, 1024
        $region48: #{tpu_custom_call.1} parent=43 // pred_fallthru
          _
      $region44: #{tpu_custom_call.1} parent=5 // pred_fallthru
        _
    $region6: #{tpu_custom_call.1} parent=1 // loop_footer
      %s19 = sadd.s32 1, %s15
    $region7: #{tpu_custom_call.1} parent=1 // loop_footer_branch
      %14 = sbr.rel target = $region3
    $region8: #{tpu_custom_call.1} parent=1 // loop_exit
      _
    %1002 = vsyncpa [#allocation3], 1
    %s1003 = scalar_lea.sflag [#allocation3], 1
    %1004 = vsyncpa %s1003, 1
    %1005 = vsyncpa [#allocation6], 1
    %1006 = vsyncpa [#allocation4], 1
    %s1007 = scalar_lea.sflag [#allocation4], 1
    %1008 = vsyncpa %s1007, 1

</llo_original>
